<compile_context>
chip_gen: v7x
topology: tpu7x:2x2x1
jax: 0.10.0
libtpu: 0.0.40
codegen_flags: <defaults>
</compile_context>

<pallas_src>
import jax
import jax.numpy as jnp
from jax.experimental import pallas as pl
from jax.experimental.pallas import tpu as pltpu


def _round_up(n, t):
    return ((n + t - 1) // t) * t


def _pick_tk(Din, tk_max):
    """K tile that avoids K padding when possible.

    Returns Din itself if it fits in one block (full-dim blocks are always
    legal), else the largest multiple-of-128 divisor of Din <= tk_max, else
    tk_max (caller zero-pads K).
    """
    if Din <= tk_max:
        return Din
    best = None
    d = 128
    while d <= tk_max:
        if Din % d == 0:
            best = d
        d += 128
    return best if best is not None else tk_max


def prepare_params(w6, b6, w7, b7, *, tk_max=2048):
    """One-time pad + bf16 cast of the static weights (hoisted out of the
    per-call path). w6: (Din, R), w7: (R, R) -- i.e. W.T of the torch layout."""
    Din, R = w6.shape
    tk = _pick_tk(Din, tk_max)
    Kp = _round_up(Din, tk)
    Rp = _round_up(R, 128)

    w6p = jnp.zeros((Kp, Rp), jnp.bfloat16).at[:Din, :R].set(
        w6.astype(jnp.bfloat16))
    w7p = jnp.zeros((Rp, Rp), jnp.bfloat16).at[:R, :R].set(
        w7.astype(jnp.bfloat16))
    b6p = jnp.zeros((1, Rp), jnp.float32).at[:, :R].set(
        b6.astype(jnp.float32)[None, :])
    b7p = jnp.zeros((1, Rp), jnp.float32).at[:, :R].set(
        b7.astype(jnp.float32)[None, :])
    return {"w6": w6p, "b6": b6p, "w7": w7p, "b7": b7p,
            "Din": Din, "R": R, "Kp": Kp, "Rp": Rp, "tk": tk}


def two_mlp_head_kernel(x_ref, w6_ref, b6_ref, w7_ref, b7_ref, o_ref, acc_ref):
    k = pl.program_id(1)

    @pl.when(k == 0)
    def _():
        acc_ref[...] = jnp.zeros_like(acc_ref)

    # Partial fc6: cast the f32 x tile to bf16 in-register (avoids a separate
    # HBM pad/cast pass over x) and accumulate on the MXU in f32.
    a = x_ref[...].astype(jnp.bfloat16)
    acc_ref[...] += jnp.dot(a, w6_ref[...], preferred_element_type=jnp.float32)

    @pl.when(k == pl.num_programs(1) - 1)
    def _():
        h = jnp.maximum(acc_ref[...] + b6_ref[...], 0.0)        # fc6 bias + ReLU
        y = jnp.dot(h.astype(w7_ref.dtype), w7_ref[...],        # fc7 on the MXU
                    preferred_element_type=jnp.float32)
        y = jnp.maximum(y + b7_ref[...], 0.0)                   # fc7 bias + ReLU
        o_ref[...] = y.astype(o_ref.dtype)


def _w6_block_spec(tk, Rp, k_tiles):
    idx = lambda m, k: (k, 0)
    if k_tiles >= 3:
        # Deeper buffering on the dominant HBM stream; harmless fallback if
        # this BlockSpec signature lacks pipeline_mode.
        try:
            return pl.BlockSpec((tk, Rp), idx, pipeline_mode=pl.Buffered(3))
        except TypeError:
            pass
    return pl.BlockSpec((tk, Rp), idx)


def two_mlp_head(x_flat, prep, *, tm=256, out_dtype=jnp.float32):
    """y = relu(relu(x_flat @ w6 + b6) @ w7 + b7), tiled over (M, K)."""
    B, Din = x_flat.shape
    assert Din == prep["Din"], (Din, prep["Din"])
    R, Rp, Kp, tk = prep["R"], prep["Rp"], prep["Kp"], prep["tk"]

    # M tiling: single resident tile when the batch fits (W6 streams from HBM
    # exactly once); otherwise tm-row tiles on a "parallel" axis (megacore).
    if B <= tm:
        tm_eff, Mp = B, B                 # block == full dim, no M padding
    else:
        tm_eff = tm
        Mp = _round_up(B, tm_eff)

    # Only pad x when a ragged M tail / ragged K actually exists.
    xp = x_flat.astype(jnp.float32)
    if (Mp, Kp) != (B, Din):
        xp = jnp.zeros((Mp, Kp), jnp.float32).at[:B, :Din].set(xp)

    m_tiles = Mp // tm_eff
    k_tiles = Kp // tk
    grid = (m_tiles, k_tiles)

    out_bytes = jnp.dtype(out_dtype).itemsize
    w6_bufs = 3 if k_tiles >= 3 else 2

    # VMEM budget from the tile plan; clamp to <=56 MiB so v7x (64 MiB
    # physical) keeps headroom for compiler-internal scratch.
    vmem_est = (2 * tm_eff * tk * 4             # x tiles (f32, double-buffered)
                + w6_bufs * tk * Rp * 2          # w6 stream (bf16)
                + 2 * Rp * Rp * 2                # w7 (constant index; conservative)
                + 4 * Rp * 4                     # biases
                + tm_eff * Rp * 4                # f32 accumulator scratch
                + 2 * tm_eff * Rp * out_bytes)   # output tiles
    vmem_limit = int(min(max(vmem_est + (8 << 20), 32 << 20), 56 << 20))

    flops = 2 * B * Din * R + 2 * B * R * R
    bytes_accessed = (Mp * Kp * 4                # x read once (f32)
                      + m_tiles * Kp * Rp * 2    # w6 re-streamed per M tile
                      + Rp * Rp * 2              # w7 (resident, fetched once)
                      + 2 * Rp * 4               # biases
                      + Mp * Rp * out_bytes)     # output writeback

    out_padded = pl.pallas_call(
        two_mlp_head_kernel,
        out_shape=jax.ShapeDtypeStruct((Mp, Rp), out_dtype),
        grid_spec=pltpu.PrefetchScalarGridSpec(
            num_scalar_prefetch=0,
            grid=grid,
            in_specs=[
                pl.BlockSpec((tm_eff, tk), lambda m, k: (m, k)),   # x  (streamed)
                _w6_block_spec(tk, Rp, k_tiles),                   # w6 (streamed)
                pl.BlockSpec((1, Rp), lambda m, k: (0, 0)),        # b6 (resident)
                pl.BlockSpec((Rp, Rp), lambda m, k: (0, 0)),       # w7 (resident)
                pl.BlockSpec((1, Rp), lambda m, k: (0, 0)),        # b7 (resident)
            ],
            out_specs=pl.BlockSpec((tm_eff, Rp), lambda m, k: (m, 0)),
            scratch_shapes=[pltpu.VMEM((tm_eff, Rp), jnp.float32)],
        ),
        compiler_params=pltpu.CompilerParams(
            dimension_semantics=("parallel", "arbitrary"),
            vmem_limit_bytes=vmem_limit,
        ),
        cost_estimate=pl.CostEstimate(
            flops=int(flops),
            transcendentals=0,
            bytes_accessed=int(bytes_accessed)),
    )(xp, prep["w6"], prep["b6"], prep["w7"], prep["b7"])

    if (Mp, Rp) != (B, R):
        return out_padded[:B, :R]
    return out_padded


def two_mlp_head_forward(x_nchw, prep, *, tm=256, out_dtype=jnp.float32):
    # Glue: flatten NCHW -> (B, C*H*W), same as x.flatten(start_dim=1) in torch.
    B = x_nchw.shape[0]
    x_flat = x_nchw.reshape(B, -1)
    return two_mlp_head(x_flat, prep, tm=tm, out_dtype=out_dtype)


def init_params(key, in_channels, representation_size):
    # Deterministic synthetic init (shapes match nn.Linear(in, rep) / (rep, rep));
    # weights stored as (in_features, out_features) == W.T of the torch layout.
    k6w, k6b, k7w, k7b = jax.random.split(key, 4)
    s6 = 1.0 / jnp.sqrt(in_channels)
    s7 = 1.0 / jnp.sqrt(representation_size)
    return {
        "w6": jax.random.uniform(k6w, (in_channels, representation_size),
                                 jnp.float32, -s6, s6),
        "b6": jax.random.uniform(k6b, (representation_size,),
                                 jnp.float32, -s6, s6),
        "w7": jax.random.uniform(k7w, (representation_size, representation_size),
                                 jnp.float32, -s7, s7),
        "b7": jax.random.uniform(k7b, (representation_size,),
                                 jnp.float32, -s7, s7),
    }


if __name__ == "__main__":
    # Small shapes consistent with the module: input (B, C, H, W) flattened to
    # in_channels = C*H*W, with a small representation_size.
    B, C, H, W = 8, 4, 8, 8
    in_channels = C * H * W          # 256
    representation_size = 256

    key = jax.random.PRNGKey(0)
    kx, kp = jax.random.split(key)
    x = jax.random.normal(kx, (B, C, H, W), jnp.float32)
    params = init_params(kp, in_channels, representation_size)

    # One-time weight pad/cast (hoisted out of the forward path).
    # tk_max=128 so this small test exercises the K-accumulation path (2 K steps).
    prep = prepare_params(params["w6"], params["b6"],
                          params["w7"], params["b7"], tk_max=128)

    out = two_mlp_head_forward(x, prep)          # tm=256 -> single resident M tile
    out = jax.block_until_ready(out)

    # Pure-JAX f32 reference; loose tolerance because the kernel streams
    # x/W6/W7 through bf16 on the MXU (f32 accumulation).
    x_flat = x.reshape(B, -1)
    ref = jnp.maximum(x_flat @ params["w6"] + params["b6"], 0.0)
    ref = jnp.maximum(ref @ params["w7"] + params["b7"], 0.0)

    assert out.shape == (B, representation_size)
    assert jnp.allclose(out, ref, atol=5e-2, rtol=5e-2), \
        float(jnp.max(jnp.abs(out - ref)))

    print("KERNEL_OK")
</pallas_src>

<mosaic_0001>
module attributes {stable_mosaic.version = 11 : i64} {
  func.func @two_mlp_head_kernel(%arg0: i32, %arg1: i32, %arg2: memref<8x128xf32, #tpu.memory_space<vmem>>, %arg3: memref<128x256xbf16, #tpu.memory_space<vmem>>, %arg4: memref<1x256xf32, #tpu.memory_space<vmem>>, %arg5: memref<256x256xbf16, #tpu.memory_space<vmem>>, %arg6: memref<1x256xf32, #tpu.memory_space<vmem>>, %arg7: memref<8x256xf32, #tpu.memory_space<vmem>>, %arg8: memref<8x256xf32, #tpu.memory_space<vmem>>) attributes {dimension_semantics = [#tpu.dimension_semantics<parallel>, #tpu.dimension_semantics<arbitrary>], iteration_bounds = array<i64: 1, 2>, scalar_prefetch = 0 : i64, scratch_operands = 1 : i64, tpu.core_type = #tpu.core_type<tc>, window_params = [{transform_indices = @transform_0, window_bounds = array<i64: 8, 128>}, {transform_indices = @transform_1, window_bounds = array<i64: 128, 256>}, {pipeline_mode = #tpu.pipeline_mode<synchronous>, transform_indices = @transform_2, window_bounds = array<i64: 1, 256>}, {pipeline_mode = #tpu.pipeline_mode<synchronous>, transform_indices = @transform_3, window_bounds = array<i64: 256, 256>}, {pipeline_mode = #tpu.pipeline_mode<synchronous>, transform_indices = @transform_4, window_bounds = array<i64: 1, 256>}, {transform_indices = @transform_5, window_bounds = array<i64: 8, 256>}]} {
    %c0_i32 = arith.constant 0 : i32
    %0 = arith.cmpi eq, %arg1, %c0_i32 : i32
    %1 = arith.extui %0 : i1 to i32
    %c0_i32_0 = arith.constant 0 : i32
    %2 = arith.cmpi ne, %1, %c0_i32_0 : i32
    scf.if %2 {
      %cst_9 = arith.constant 0.000000e+00 : f32
      %13 = vector.broadcast %cst_9 : f32 to vector<8x256xf32>
      %c0_10 = arith.constant 0 : index
      %c0_11 = arith.constant 0 : index
      %14 = vector.load %arg8[%c0_10, %c0_11] : memref<8x256xf32, #tpu.memory_space<vmem>>, vector<8x256xf32>
      tpu.vector_store %arg8[%c0_10, %c0_11], %13 {strides = array<i32>} : memref<8x256xf32, #tpu.memory_space<vmem>>, vector<8x256xf32>,
    } else {
    }
    %c0 = arith.constant 0 : index
    %c0_1 = arith.constant 0 : index
    %3 = vector.load %arg2[%c0, %c0_1] : memref<8x128xf32, #tpu.memory_space<vmem>>, vector<8x128xf32>
    %4 = arith.truncf %3 : vector<8x128xf32> to vector<8x128xbf16>
    %c0_2 = arith.constant 0 : index
    %c0_3 = arith.constant 0 : index
    %5 = vector.load %arg8[%c0_2, %c0_3] : memref<8x256xf32, #tpu.memory_space<vmem>>, vector<8x256xf32>
    %c0_4 = arith.constant 0 : index
    %c0_5 = arith.constant 0 : index
    %6 = vector.load %arg3[%c0_4, %c0_5] : memref<128x256xbf16, #tpu.memory_space<vmem>>, vector<128x256xbf16>
    %cst = arith.constant dense<0.000000e+00> : vector<8x256xf32>
    %7 = tpu.matmul %4, %6, %cst {dimension_numbers = #tpu.dot_dimension_numbers<[1], [0], [0], [1], [0, 0, 1, 1], [], []>} : vector<8x128xbf16>, vector<128x256xbf16>, vector<8x256xf32> -> vector<8x256xf32>
    %8 = arith.addf %5, %7 : vector<8x256xf32>
    %c0_6 = arith.constant 0 : index
    %c0_7 = arith.constant 0 : index
    %9 = vector.load %arg8[%c0_6, %c0_7] : memref<8x256xf32, #tpu.memory_space<vmem>>, vector<8x256xf32>
    tpu.vector_store %arg8[%c0_6, %c0_7], %8 {strides = array<i32>} : memref<8x256xf32, #tpu.memory_space<vmem>>, vector<8x256xf32>,
    %c1_i32 = arith.constant 1 : i32
    %10 = arith.cmpi eq, %arg1, %c1_i32 : i32
    %11 = arith.extui %10 : i1 to i32
    %c0_i32_8 = arith.constant 0 : i32
    %12 = arith.cmpi ne, %11, %c0_i32_8 : i32
    scf.if %12 {
      %c0_9 = arith.constant 0 : index
      %c0_10 = arith.constant 0 : index
      %13 = vector.load %arg8[%c0_9, %c0_10] : memref<8x256xf32, #tpu.memory_space<vmem>>, vector<8x256xf32>
      %c0_11 = arith.constant 0 : index
      %c0_12 = arith.constant 0 : index
      %14 = vector.load %arg4[%c0_11, %c0_12] : memref<1x256xf32, #tpu.memory_space<vmem>>, vector<1x256xf32>
      %15 = vector.broadcast %14 : vector<1x256xf32> to vector<8x256xf32>
      %16 = arith.addf %13, %15 : vector<8x256xf32>
      %cst_13 = arith.constant 0.000000e+00 : f32
      %17 = vector.broadcast %cst_13 : f32 to vector<8x256xf32>
      %18 = arith.maximumf %16, %17 : vector<8x256xf32>
      %19 = arith.truncf %18 : vector<8x256xf32> to vector<8x256xbf16>
      %c0_14 = arith.constant 0 : index
      %c0_15 = arith.constant 0 : index
      %20 = vector.load %arg5[%c0_14, %c0_15] : memref<256x256xbf16, #tpu.memory_space<vmem>>, vector<256x256xbf16>
      %cst_16 = arith.constant dense<0.000000e+00> : vector<8x256xf32>
      %21 = tpu.matmul %19, %20, %cst_16 {dimension_numbers = #tpu.dot_dimension_numbers<[1], [0], [0], [1], [0, 0, 1, 1], [], []>} : vector<8x256xbf16>, vector<256x256xbf16>, vector<8x256xf32> -> vector<8x256xf32>
      %c0_17 = arith.constant 0 : index
      %c0_18 = arith.constant 0 : index
      %22 = vector.load %arg6[%c0_17, %c0_18] : memref<1x256xf32, #tpu.memory_space<vmem>>, vector<1x256xf32>
      %23 = vector.broadcast %22 : vector<1x256xf32> to vector<8x256xf32>
      %24 = arith.addf %21, %23 : vector<8x256xf32>
      %cst_19 = arith.constant 0.000000e+00 : f32
      %25 = vector.broadcast %cst_19 : f32 to vector<8x256xf32>
      %26 = arith.maximumf %24, %25 : vector<8x256xf32>
      %c0_20 = arith.constant 0 : index
      %c0_21 = arith.constant 0 : index
      %27 = vector.load %arg7[%c0_20, %c0_21] : memref<8x256xf32, #tpu.memory_space<vmem>>, vector<8x256xf32>
      tpu.vector_store %arg7[%c0_20, %c0_21], %26 {strides = array<i32>} : memref<8x256xf32, #tpu.memory_space<vmem>>, vector<8x256xf32>,
    } else {
    }
    return
  }
  func.func @transform_0(%arg0: i32, %arg1: i32) -> (i32, i32) {
    %c0_i32 = arith.constant 0 : i32
    return %arg0, %arg1 : i32, i32
  }
  func.func @transform_1(%arg0: i32, %arg1: i32) -> (i32, i32) {
    %c0_i32 = arith.constant 0 : i32
    %c0_i32_0 = arith.constant 0 : i32
    return %arg1, %c0_i32 : i32, i32
  }
  func.func @transform_2(%arg0: i32, %arg1: i32) -> (i32, i32) {
    %c0_i32 = arith.constant 0 : i32
    %c0_i32_0 = arith.constant 0 : i32
    %c0_i32_1 = arith.constant 0 : i32
    return %c0_i32, %c0_i32_0 : i32, i32
  }
  func.func @transform_3(%arg0: i32, %arg1: i32) -> (i32, i32) {
    %c0_i32 = arith.constant 0 : i32
    %c0_i32_0 = arith.constant 0 : i32
    %c0_i32_1 = arith.constant 0 : i32
    return %c0_i32, %c0_i32_0 : i32, i32
  }
  func.func @transform_4(%arg0: i32, %arg1: i32) -> (i32, i32) {
    %c0_i32 = arith.constant 0 : i32
    %c0_i32_0 = arith.constant 0 : i32
    %c0_i32_1 = arith.constant 0 : i32
    return %c0_i32, %c0_i32_0 : i32, i32
  }
  func.func @transform_5(%arg0: i32, %arg1: i32) -> (i32, i32) {
    %c0_i32 = arith.constant 0 : i32
    %c0_i32_0 = arith.constant 0 : i32
    return %arg0, %c0_i32 : i32, i32
  }
}

</mosaic_0001>

<llo_original>
// kernel: tpu_custom_call.1
$region0: #{tpu_custom_call.1}
  #allocation0 [shape = 'u32[]', space=smem, size = 0x4, offset = 0x4, fixed_abs, tag = 'smem constant byte address 0x4 - core index']
  #allocation1 [shape = 'u32[144,128]{1,0:T(1,128)}', space=vmem, size = 0x12000, scoped, tag = 'internal scratch']
  #allocation2 [shape = 'f32[8,256]{1,0:T(8,128)}', space=vmem, size = 0x2000, scoped, tag = 'scratch operand']
  %s0 = inlined_call_operand.hbm [shape: f32[8,256], index: 0, kind: input, shape index: {}]
  %s1 = inlined_call_operand.hbm [shape: bf16[256,256], index: 1, kind: input, shape index: {}]
  %s2 = inlined_call_operand.vmem [shape: f32[1,256], index: 2, kind: input, shape index: {}]
  %s3 = inlined_call_operand.hbm [shape: bf16[256,256], index: 3, kind: input, shape index: {}]
  %s4 = inlined_call_operand.vmem [shape: f32[1,256], index: 4, kind: input, shape index: {}]
  %s5 = inlined_call_operand.hbm [shape: f32[8,256], index: 5, kind: output, shape index: {}]
  %s6 = sld [smem:[#allocation0]]
  $region73: #{tpu_custom_call.1} parent=0
    _
  %s8 = ssub.s32 1, %s6
  %s9 = scalar_select 0, %s8, %s6
  $region1: #{tpu_custom_call.1} parent=0
    #allocation3 [shape = 'u8[8192]{0}', space=vmem, size = 0x2000, scoped, tag = 'input window, operand 0']
    #allocation4 [shape = 's32[2]{0}', space=sflag, size = 0x8, scoped, tag = 'scoped memory for tpu_custom_call.1']
    #allocation5 [shape = 's32[2]{0}', space=sflag, size = 0x8, scoped, tag = 'scoped memory for tpu_custom_call.1']
    #allocation6 [shape = 'u8[131072]{0}', space=vmem, size = 0x20000, scoped, tag = 'input window, operand 1']
    #allocation7 [shape = 's32[2]{0}', space=sflag, size = 0x8, scoped, tag = 'scoped memory for tpu_custom_call.1']
    #allocation8 [shape = 'u8[131072]{0}', space=vmem, size = 0x20000, scoped, tag = 'input window, operand 3, single buffered']
    #allocation9 [shape = 'u8[8192]{0}', space=vmem, size = 0x2000, scoped, tag = 'output window, operand 0, single buffered']
    %10 = vsyncpa [#allocation4], 0
    %s11 = scalar_lea.sflag [#allocation4], 1
    %12 = vsyncpa %s11, 0
    %13 = vsyncpa [#allocation7], 0
    %s14 = scalar_lea.sflag [#allocation7], 1
    %15 = vsyncpa %s14, 0
    %16 = vsyncpa [#allocation5], 0
    loop: start=0, step=1, limit=4
    $region2: #{tpu_custom_call.1} parent=1 // loop_pre_header
      _
    $region3: #{tpu_custom_call.1} parent=1 // loop_header
      %s18 = sphi 0, %s22
      %p19 = scmp.ge.s32.totalorder %s18, 4
      %s25 = sphi 0, %s37
      %s26 = sphi 0, %s33
      %s27 = sphi 0, %s25
      %s28 = sphi 0, %s26
      %s29 = sphi 0, %s27
      %s30 = sphi 0, %s28
      %s42 = sphi 0, %s44
      %s45 = sphi 0, %s42
      %s46 = sphi 0, %s45
      %s62 = sphi 0, %s46
      %s68 = sphi 0, %s70
      %s71 = sphi 0, %s68
      %s72 = sphi 0, %s71
      %s88 = sphi 0, %s72
      %s92 = sphi 0, %s92
      %s94 = sphi 0, %s92
      %s95 = sphi 0, %s94
      %s109 = sphi 0, %s95
      %s113 = sphi 0, %s113
      %s115 = sphi 0, %s113
      %s116 = sphi 0, %s115
      %s130 = sphi 0, %s116
      %s134 = sphi 0, %s134
      %s136 = sphi 0, %s134
      %s137 = sphi 0, %s136
      %s151 = sphi 0, %s137
      %s157 = sphi 0, %s159
      %s160 = sphi 0, %s157
      %s161 = sphi 0, %s160
      %s177 = sphi 0, %s161
    $region4: #{tpu_custom_call.1} parent=1 // loop_header_branch
      %21 = sbr.rel (%p19) target = $region8
    $region5: #{tpu_custom_call.1} parent=1 // loop_body
      %s23 = ssub.s32 %s18, 1
      %s24 = ssub.s32 %s18, 2
      %s31 = sadd.s32 1, %s26
      %p32 = scmp.ge.s32.totalorder %s31, 2
      %s33 = scalar_select %p32, 0, %s31
      %s34 = sadd.s32 1, %s25
      %s35 = scalar_select %p32, %s34, %s25
      %p36 = scmp.ge.s32.totalorder %s35, 1
      %s37 = scalar_select %p36, 0, %s35
      %s38 = ssub.s32 %s25, %s37
      %s39 = ssub.s32 %s26, %s33
      %s40 = sor.u32 %s38, %s39
      %p41 = scmp.eq.s32.totalorder %s40, 0
      %s43 = sadd.s32 %s42, 1
      %s44 = scalar_select %p41, %s42, %s43
      %p47 = pneg %p41
      %p48 = scmp.eq.s32.totalorder %s18, 1
      %p49 = por %p47, %p48
      %p50 = scmp.ne.s32.totalorder %s42, %s45
      %p51 = scmp.eq.s32.totalorder %s18, 0
      %p52 = por %p50, %p51
      %p53 = scmp.ne.s32.totalorder %s42, %s45
      %p54 = scmp.eq.s32.totalorder %s23, 1
      %p55 = por %p53, %p54
      %p56 = scmp.ne.s32.totalorder %s45, %s46
      %p57 = scmp.eq.s32.totalorder %s23, 0
      %p58 = por %p56, %p57
      %p59 = scmp.ne.s32.totalorder %s45, %s46
      %p60 = scmp.eq.s32.totalorder %s24, 1
      %p61 = por %p59, %p60
      %p63 = scmp.ne.s32.totalorder %s46, %s62
      %p64 = scmp.eq.s32.totalorder %s24, 0
      %p65 = por %p63, %p64
      %s66 = ssub.s32 %s26, %s33
      %p67 = scmp.eq.s32.totalorder %s66, 0
      %s69 = sadd.s32 %s68, 1
      %s70 = scalar_select %p67, %s68, %s69
      %p73 = pneg %p67
      %p74 = scmp.eq.s32.totalorder %s18, 1
      %p75 = por %p73, %p74
      %p76 = scmp.ne.s32.totalorder %s68, %s71
      %p77 = scmp.eq.s32.totalorder %s18, 0
      %p78 = por %p76, %p77
      %p79 = scmp.ne.s32.totalorder %s68, %s71
      %p80 = scmp.eq.s32.totalorder %s23, 1
      %p81 = por %p79, %p80
      %p82 = scmp.ne.s32.totalorder %s71, %s72
      %p83 = scmp.eq.s32.totalorder %s23, 0
      %p84 = por %p82, %p83
      %p85 = scmp.ne.s32.totalorder %s71, %s72
      %p86 = scmp.eq.s32.totalorder %s24, 1
      %p87 = por %p85, %p86
      %p89 = scmp.ne.s32.totalorder %s72, %s88
      %p90 = scmp.eq.s32.totalorder %s24, 0
      %p91 = por %p89, %p90
      %s93 = sadd.s32 %s92, 1
      %p96 = scmp.eq.s32.totalorder %s18, 1
      %p97 = scmp.ne.s32.totalorder %s92, %s94
      %p98 = scmp.eq.s32.totalorder %s18, 0
      %p99 = por %p97, %p98
      %p100 = scmp.ne.s32.totalorder %s92, %s94
      %p101 = scmp.eq.s32.totalorder %s23, 1
      %p102 = por %p100, %p101
      %p103 = scmp.ne.s32.totalorder %s94, %s95
      %p104 = scmp.eq.s32.totalorder %s23, 0
      %p105 = por %p103, %p104
      %p106 = scmp.ne.s32.totalorder %s94, %s95
      %p107 = scmp.eq.s32.totalorder %s24, 1
      %p108 = por %p106, %p107
      %p110 = scmp.ne.s32.totalorder %s95, %s109
      %p111 = scmp.eq.s32.totalorder %s24, 0
      %p112 = por %p110, %p111
      %s114 = sadd.s32 %s113, 1
      %p117 = scmp.eq.s32.totalorder %s18, 1
      %p118 = scmp.ne.s32.totalorder %s113, %s115
      %p119 = scmp.eq.s32.totalorder %s18, 0
      %p120 = por %p118, %p119
      %p121 = scmp.ne.s32.totalorder %s113, %s115
      %p122 = scmp.eq.s32.totalorder %s23, 1
      %p123 = por %p121, %p122
      %p124 = scmp.ne.s32.totalorder %s115, %s116
      %p125 = scmp.eq.s32.totalorder %s23, 0
      %p126 = por %p124, %p125
      %p127 = scmp.ne.s32.totalorder %s115, %s116
      %p128 = scmp.eq.s32.totalorder %s24, 1
      %p129 = por %p127, %p128
      %p131 = scmp.ne.s32.totalorder %s116, %s130
      %p132 = scmp.eq.s32.totalorder %s24, 0
      %p133 = por %p131, %p132
      %s135 = sadd.s32 %s134, 1
      %p138 = scmp.eq.s32.totalorder %s18, 1
      %p139 = scmp.ne.s32.totalorder %s134, %s136
      %p140 = scmp.eq.s32.totalorder %s18, 0
      %p141 = por %p139, %p140
      %p142 = scmp.ne.s32.totalorder %s134, %s136
      %p143 = scmp.eq.s32.totalorder %s23, 1
      %p144 = por %p142, %p143
      %p145 = scmp.ne.s32.totalorder %s136, %s137
      %p146 = scmp.eq.s32.totalorder %s23, 0
      %p147 = por %p145, %p146
      %p148 = scmp.ne.s32.totalorder %s136, %s137
      %p149 = scmp.eq.s32.totalorder %s24, 1
      %p150 = por %p148, %p149
      %p152 = scmp.ne.s32.totalorder %s137, %s151
      %p153 = scmp.eq.s32.totalorder %s24, 0
      %p154 = por %p152, %p153
      %s155 = ssub.s32 %s25, %s37
      %p156 = scmp.eq.s32.totalorder %s155, 0
      %s158 = sadd.s32 %s157, 1
      %s159 = scalar_select %p156, %s157, %s158
      %p162 = pneg %p156
      %p163 = scmp.eq.s32.totalorder %s18, 1
      %p164 = por %p162, %p163
      %p165 = scmp.ne.s32.totalorder %s157, %s160
      %p166 = scmp.eq.s32.totalorder %s18, 0
      %p167 = por %p165, %p166
      %p168 = scmp.ne.s32.totalorder %s157, %s160
      %p169 = scmp.eq.s32.totalorder %s23, 1
      %p170 = por %p168, %p169
      %p171 = scmp.ne.s32.totalorder %s160, %s161
      %p172 = scmp.eq.s32.totalorder %s23, 0
      %p173 = por %p171, %p172
      %p174 = scmp.ne.s32.totalorder %s160, %s161
      %p175 = scmp.eq.s32.totalorder %s24, 1
      %p176 = por %p174, %p175
      %p178 = scmp.ne.s32.totalorder %s161, %s177
      %p179 = scmp.eq.s32.totalorder %s24, 0
      %p180 = por %p178, %p179
      %p181 = scmp.le.s32.totalorder 1, %s18
      %p182 = scmp.lt.s32.totalorder %s18, 3
      %p183 = pnand %p181, %p182
      %p184 = pneg %p183
      // Predicated region
      $region9: #{tpu_custom_call.1} parent=5 // pred_check
        _
      $region10: #{tpu_custom_call.1} parent=5 // pred_check_branch
        %186 = sbr.rel (%p183) target = $region12
      $region11: #{tpu_custom_call.1} parent=5 // pred_region
        %s187 = ssub.s32 %s18, 1
        // Predicated region
        $region13: #{tpu_custom_call.1} parent=11 // pred_check
          %p188 = pneg %p105
        $region14: #{tpu_custom_call.1} parent=11 // pred_check_branch
          %190 = sbr.rel (%p188) target = $region16
        $region15: #{tpu_custom_call.1} parent=11 // pred_region
          _
        $region16: #{tpu_custom_call.1} parent=11 // pred_fallthru
          _
        // Predicated region
        $region17: #{tpu_custom_call.1} parent=11 // pred_check
          %p191 = pneg %p126
        $region18: #{tpu_custom_call.1} parent=11 // pred_check_branch
          %193 = sbr.rel (%p191) target = $region20
        $region19: #{tpu_custom_call.1} parent=11 // pred_region
          %s195 = ssub.s32 4096, 4096
          %196 = vsyncadd [#allocation7], %s195
          %s197 = sshll.u32 [#allocation8], 4
          %s198 = int_to_ptr.vmem [resolvable:$true] %s197
          %203 = dma.hbm_to_vmem [thread:$0]  %s3, 4096, %s198, [#allocation7], 128, 128, 8
        $region20: #{tpu_custom_call.1} parent=11 // pred_fallthru
          _
        // Predicated region
        $region21: #{tpu_custom_call.1} parent=11 // pred_check
          %p204 = pneg %p147
        $region22: #{tpu_custom_call.1} parent=11 // pred_check_branch
          %206 = sbr.rel (%p204) target = $region24
        $region23: #{tpu_custom_call.1} parent=11 // pred_region
          _
        $region24: #{tpu_custom_call.1} parent=11 // pred_fallthru
          _
      $region12: #{tpu_custom_call.1} parent=5 // pred_fallthru
        _
      %p207 = scmp.lt.s32.totalorder %s18, 2
      // Predicated region
      $region25: #{tpu_custom_call.1} parent=5 // pred_check
        %p208 = pneg %p207
      $region26: #{tpu_custom_call.1} parent=5 // pred_check_branch
        %210 = sbr.rel (%p208) target = $region28
      $region27: #{tpu_custom_call.1} parent=5 // pred_region
        // Predicated region
        $region29: #{tpu_custom_call.1} parent=27 // pred_check
          %p211 = pneg %p52
        $region30: #{tpu_custom_call.1} parent=27 // pred_check_branch
          %213 = sbr.rel (%p211) target = $region32
        $region31: #{tpu_custom_call.1} parent=27 // pred_region
          %s214 = sand.u32 %s42, 1
          %s215 = scalar_lea.sflag [#allocation4], %s214
          %s216 = sand.u32 %s42, 1
          %s217 = smul.addr %s216, 8
          %s218 = scalar_lea.vmem [#allocation3], %s217
          %s220 = ssub.s32 128, 128
          %221 = vsyncadd %s215, %s220
          %s222 = smul.addr %s25, 2
          %s223 = sadd.s32 %s26, %s222
          %s224 = smul.addr %s223, 128
          %s225 = scalar_lea.hbm %s0, %s224
          %s227 = sshll.u32 %s218, 4
          %s228 = int_to_ptr.vmem [resolvable:$true] %s227
          %230 = dma.hbm_to_vmem [thread:$0]  %s225, 128, %s228, %s215
        $region32: #{tpu_custom_call.1} parent=27 // pred_fallthru
          _
        // Predicated region
        $region33: #{tpu_custom_call.1} parent=27 // pred_check
          %p231 = pneg %p78
        $region34: #{tpu_custom_call.1} parent=27 // pred_check_branch
          %233 = sbr.rel (%p231) target = $region36
        $region35: #{tpu_custom_call.1} parent=27 // pred_region
          %s234 = sand.u32 %s18, 1
          %s235 = scalar_lea.sflag [#allocation7], %s234
          %s236 = sand.u32 %s68, 1
          %s237 = smul.addr %s236, 128
          %s238 = scalar_lea.vmem [#allocation6], %s237
          %s239 = smul.u32 16, %s26
          %s241 = ssub.s32 2048, 2048
          %242 = vsyncadd %s235, %s241
          %s243 = smul.addr %s239, 2
          %s244 = smul.addr %s243, 64
          %s245 = scalar_lea.hbm %s1, %s244
          %s246 = sshll.u32 %s238, 4
          %s247 = int_to_ptr.vmem [resolvable:$true] %s246
          %252 = dma.hbm_to_vmem [thread:$0]  %s245, 2048, %s247, %s235, 128, 128, 8
        $region36: #{tpu_custom_call.1} parent=27 // pred_fallthru
          _
      $region28: #{tpu_custom_call.1} parent=5 // pred_fallthru
        _
      %p253 = scmp.le.s32.totalorder 1, %s18
      %p254 = scmp.lt.s32.totalorder %s18, 3
      %p255 = pnand %p253, %p254
      %p256 = pneg %p255
      // Predicated region
      $region37: #{tpu_custom_call.1} parent=5 // pred_check
        _
      $region38: #{tpu_custom_call.1} parent=5 // pred_check_branch
        %258 = sbr.rel (%p255) target = $region40
      $region39: #{tpu_custom_call.1} parent=5 // pred_region
        %s259 = ssub.s32 %s18, 1
        %s260 = sand.u32 %s45, 1
        %s261 = scalar_lea.sflag [#allocation4], %s260
        %s262 = sand.u32 %s45, 1
        %s263 = smul.addr %s262, 8
        %s264 = scalar_lea.vmem [#allocation3], %s263
        // Predicated region
        $region41: #{tpu_custom_call.1} parent=39 // pred_check
          %p265 = pneg %p58
        $region42: #{tpu_custom_call.1} parent=39 // pred_check_branch
          %267 = sbr.rel (%p265) target = $region44
        $region43: #{tpu_custom_call.1} parent=39 // pred_region
          %268 = dma.done %s261, 128
        $region44: #{tpu_custom_call.1} parent=39 // pred_fallthru
          _
        %s269 = sand.u32 %s23, 1
        %s270 = scalar_lea.sflag [#allocation7], %s269
        %s271 = sand.u32 %s71, 1
        %s272 = smul.addr %s271, 128
        %s273 = scalar_lea.vmem [#allocation6], %s272
        // Predicated region
        $region45: #{tpu_custom_call.1} parent=39 // pred_check
          %p274 = pneg %p84
        $region46: #{tpu_custom_call.1} parent=39 // pred_check_branch
          %276 = sbr.rel (%p274) target = $region48
        $region47: #{tpu_custom_call.1} parent=39 // pred_region
          %277 = dma.done %s270, 2048
        $region48: #{tpu_custom_call.1} parent=39 // pred_fallthru
          _
        // Predicated region
        $region49: #{tpu_custom_call.1} parent=39 // pred_check
          %p278 = pneg %p126
        $region50: #{tpu_custom_call.1} parent=39 // pred_check_branch
          %280 = sbr.rel (%p278) target = $region52
        $region51: #{tpu_custom_call.1} parent=39 // pred_region
          %281 = dma.done [#allocation7], 4096
        $region52: #{tpu_custom_call.1} parent=39 // pred_fallthru
          _
        %s282 = sand.u32 %s45, 1
        %s283 = scalar_lea.sflag [#allocation4], %s282
        %s284 = sand.u32 %s45, 1
        %s285 = smul.addr %s284, 8
        %s286 = scalar_lea.vmem [#allocation3], %s285
        %p287 = pneg %p58
        %p288 = pneg %p55
        %s289 = sand.u32 %s23, 1
        %s290 = scalar_lea.sflag [#allocation7], %s289
        %s291 = sand.u32 %s71, 1
        %s292 = smul.addr %s291, 128
        %s293 = scalar_lea.vmem [#allocation6], %s292
        %p294 = pneg %p84
        %p295 = pneg %p81
        %p296 = pneg %p105
        %p297 = pneg %p102
        %p298 = pneg %p126
        %p299 = pneg %p123
        %p300 = pneg %p147
        %p301 = pneg %p144
        %p302 = pneg %p173
        %p303 = pneg %p170
        %s304 = smul.u32 16, %s28
        %p306 = scmp.eq.s32.totalorder %s28, 0
        // Predicated region
        $region53: #{tpu_custom_call.1} parent=39 // pred_check
          %p307 = pneg %p306
        $region54: #{tpu_custom_call.1} parent=39 // pred_check_branch
          %309 = sbr.rel (%p307) target = $region56
        $region55: #{tpu_custom_call.1} parent=39 // pred_region
          %310 = vst [vmem:[#allocation2] sm:$0xff] 0.0
          %311 = vst [vmem:[#allocation2 + $0x8] sm:$0xff] 0.0
        $region56: #{tpu_custom_call.1} parent=39 // pred_fallthru
          _
        %v312 = vld [vmem:[%s264] sm:$0xff]
        %v313 = vpack.c.bf16 %v312, %v312
        %v314 = vld [vmem:[#allocation2] sm:$0xff]
        %v315 = vld [vmem:[#allocation2 + $0x8] sm:$0xff]
        %v316 = vld [vmem:[%s273] sm:$0xff]
        %v317 = vld [vmem:[%s273 + $0x8] sm:$0xff]
        %v318 = vld [vmem:[%s273 + $0x10] sm:$0xff]
        %v319 = vld [vmem:[%s273 + $0x18] sm:$0xff]
        %v320 = vld [vmem:[%s273 + $0x20] sm:$0xff]
        %v321 = vld [vmem:[%s273 + $0x28] sm:$0xff]
        %v322 = vld [vmem:[%s273 + $0x30] sm:$0xff]
        %v323 = vld [vmem:[%s273 + $0x38] sm:$0xff]
        %v324 = vld [vmem:[%s273 + $0x40] sm:$0xff]
        %v325 = vld [vmem:[%s273 + $0x48] sm:$0xff]
        %v326 = vld [vmem:[%s273 + $0x50] sm:$0xff]
        %v327 = vld [vmem:[%s273 + $0x58] sm:$0xff]
        %v328 = vld [vmem:[%s273 + $0x60] sm:$0xff]
        %v329 = vld [vmem:[%s273 + $0x68] sm:$0xff]
        %v330 = vld [vmem:[%s273 + $0x70] sm:$0xff]
        %v331 = vld [vmem:[%s273 + $0x78] sm:$0xff]
        %v348 = vunpack.c.l.b16 %v316
        %v349 = vunpack.c.h.b16 %v316
        %v350 = vunpack.c.l.b16 %v317
        %v351 = vunpack.c.h.b16 %v317
        %v352 = vunpack.c.l.b16 %v318
        %v353 = vunpack.c.h.b16 %v318
        %v354 = vunpack.c.l.b16 %v319
        %v355 = vunpack.c.h.b16 %v319
        %v356 = vunpack.c.l.b16 %v320
        %v357 = vunpack.c.h.b16 %v320
        %v358 = vunpack.c.l.b16 %v321
        %v359 = vunpack.c.h.b16 %v321
        %v360 = vunpack.c.l.b16 %v322
        %v361 = vunpack.c.h.b16 %v322
        %v362 = vunpack.c.l.b16 %v323
        %v363 = vunpack.c.h.b16 %v323
        %v364 = vunpack.c.l.b16 %v324
        %v365 = vunpack.c.h.b16 %v324
        %v366 = vunpack.c.l.b16 %v325
        %v367 = vunpack.c.h.b16 %v325
        %v368 = vunpack.c.l.b16 %v326
        %v369 = vunpack.c.h.b16 %v326
        %v370 = vunpack.c.l.b16 %v327
        %v371 = vunpack.c.h.b16 %v327
        %v372 = vunpack.c.l.b16 %v328
        %v373 = vunpack.c.h.b16 %v328
        %v374 = vunpack.c.l.b16 %v329
        %v375 = vunpack.c.h.b16 %v329
        %v376 = vunpack.c.l.b16 %v330
        %v377 = vunpack.c.h.b16 %v330
        %v378 = vunpack.c.l.b16 %v331
        %v379 = vunpack.c.h.b16 %v331
        %v380 = vpack.c.b16 %v350, %v348
        %v381 = vpack.c.b16 %v351, %v349
        %v382 = vpack.c.b16 %v354, %v352
        %v383 = vpack.c.b16 %v355, %v353
        %v384 = vpack.c.b16 %v358, %v356
        %v385 = vpack.c.b16 %v359, %v357
        %v386 = vpack.c.b16 %v362, %v360
        %v387 = vpack.c.b16 %v363, %v361
        %v388 = vpack.c.b16 %v366, %v364
        %v389 = vpack.c.b16 %v367, %v365
        %v390 = vpack.c.b16 %v370, %v368
        %v391 = vpack.c.b16 %v371, %v369
        %v392 = vpack.c.b16 %v374, %v372
        %v393 = vpack.c.b16 %v375, %v373
        %v394 = vpack.c.b16 %v378, %v376
        %v395 = vpack.c.b16 %v379, %v377
        %412 = vmatprep.subr.bf16.mxu0 %v381
        %413 = vmatpush1.bf16.msra.mxu0 %v380
        %414 = vmatprep.subr.bf16.mxu0 %v383
        %415 = vmatpush1.bf16.msra.mxu0 %v382
        %416 = vmatprep.subr.bf16.mxu0 %v385
        %417 = vmatpush1.bf16.msra.mxu0 %v384
        %418 = vmatprep.subr.bf16.mxu0 %v387
        %419 = vmatpush1.bf16.msra.mxu0 %v386
        %420 = vmatprep.subr.bf16.mxu0 %v389
        %421 = vmatpush1.bf16.msra.mxu0 %v388
        %422 = vmatprep.subr.bf16.mxu0 %v391
        %423 = vmatpush1.bf16.msra.mxu0 %v390
        %424 = vmatprep.subr.bf16.mxu0 %v393
        %425 = vmatpush1.bf16.msra.mxu0 %v392
        %426 = vmatprep.subr.bf16.mxu0 %v395
        %427 = vmatpush1.bf16.msra.mxu0 %v394
        %428 = vmatprep.subr.bf16.mxu0 0
        %429 = vmatpush1.bf16.msra.mxu0 0
        %430 = vmatprep.subr.bf16.mxu0 0
        %431 = vmatpush1.bf16.msra.mxu0 0
        %432 = vmatprep.subr.bf16.mxu0 0
        %433 = vmatpush1.bf16.msra.mxu0 0
        %434 = vmatprep.subr.bf16.mxu0 0
        %435 = vmatpush1.bf16.msra.mxu0 0
        %436 = vmatprep.subr.bf16.mxu0 0
        %437 = vmatpush1.bf16.msra.mxu0 0
        %438 = vmatprep.subr.bf16.mxu0 0
        %439 = vmatpush1.bf16.msra.mxu0 0
        %440 = vmatprep.subr.bf16.mxu0 0
        %441 = vmatpush1.bf16.msra.mxu0 0
        %442 = vmatprep.subr.bf16.mxu0 0
        %443 = vmatpush1.bf16.msra.mxu0 0
        %444 = vmatprep.mubr.bf16.mxu0 0
        %445 = vmatmul.mubr.bf16.gmra.mrb[0].mxu0 %v313
        %v446 = vpop.f32.mrb[0].mxu0
        %v447 = vadd.f32 0.0, %v446
        %v448 = vpop.f32.mrb[0].mxu0
        %v449 = vadd.f32 0.0, %v448
        %v450 = vpop.f32.mrb[0].mxu0
        %v451 = vpop.f32.mrb[0].mxu0
        %452 = vdwg.mxu0
        %v453 = vadd.f32 %v314, %v447
        %v454 = vadd.f32 %v315, %v449
        %455 = vst [vmem:[#allocation2] sm:$0xff] %v453
        %456 = vst [vmem:[#allocation2 + $0x8] sm:$0xff] %v454
        %p457 = scmp.eq.s32.totalorder %s28, 1
        // Predicated region
        $region57: #{tpu_custom_call.1} parent=39 // pred_check
          %p458 = pneg %p457
        $region58: #{tpu_custom_call.1} parent=39 // pred_check_branch
          %460 = sbr.rel (%p458) target = $region60
        $region59: #{tpu_custom_call.1} parent=39 // pred_region
          %v461 = vld [vmem:[#allocation2] sm:$0xff]
          %v462 = vld [vmem:[#allocation2 + $0x8] sm:$0xff]
          %v463 = vld [vmem:[%s2] sm:$0x3]
          %v465 = vlaneseq
          %v466 = vshrl.u32 %v465, 7
          %v467 = vsub.s32 0, %v466
          %v468 = vrot.slane %v463, %v467
          %v469 = vlaneseq
          %v470 = vshrl.u32 %v469, 7
          %v471 = vsub.s32 1, %v470
          %v472 = vrot.slane %v463, %v471
          %v475 = vadd.f32 %v461, %v468
          %v476 = vadd.f32 %v462, %v472
          %v477 = vmax.f32 %v475, 0.0
          %v478 = vmax.f32 %v476, 0.0
          %v479 = vpack.c.bf16 %v477, %v477
          %v480 = vpack.c.bf16 %v478, %v478
          %v481 = vld [vmem:[#allocation8] sm:$0xff]
          %v482 = vld [vmem:[#allocation8 + $0x8] sm:$0xff]
          %v483 = vld [vmem:[#allocation8 + $0x10] sm:$0xff]
          %v484 = vld [vmem:[#allocation8 + $0x18] sm:$0xff]
          %v485 = vld [vmem:[#allocation8 + $0x20] sm:$0xff]
          %v486 = vld [vmem:[#allocation8 + $0x28] sm:$0xff]
          %v487 = vld [vmem:[#allocation8 + $0x30] sm:$0xff]
          %v488 = vld [vmem:[#allocation8 + $0x38] sm:$0xff]
          %v489 = vld [vmem:[#allocation8 + $0x40] sm:$0xff]
          %v490 = vld [vmem:[#allocation8 + $0x48] sm:$0xff]
          %v491 = vld [vmem:[#allocation8 + $0x50] sm:$0xff]
          %v492 = vld [vmem:[#allocation8 + $0x58] sm:$0xff]
          %v493 = vld [vmem:[#allocation8 + $0x60] sm:$0xff]
          %v494 = vld [vmem:[#allocation8 + $0x68] sm:$0xff]
          %v495 = vld [vmem:[#allocation8 + $0x70] sm:$0xff]
          %v496 = vld [vmem:[#allocation8 + $0x78] sm:$0xff]
          %v497 = vld [vmem:[#allocation8 + $0x80] sm:$0xff]
          %v498 = vld [vmem:[#allocation8 + $0x88] sm:$0xff]
          %v499 = vld [vmem:[#allocation8 + $0x90] sm:$0xff]
          %v500 = vld [vmem:[#allocation8 + $0x98] sm:$0xff]
          %v501 = vld [vmem:[#allocation8 + $0xa0] sm:$0xff]
          %v502 = vld [vmem:[#allocation8 + $0xa8] sm:$0xff]
          %v503 = vld [vmem:[#allocation8 + $0xb0] sm:$0xff]
          %v504 = vld [vmem:[#allocation8 + $0xb8] sm:$0xff]
          %v505 = vld [vmem:[#allocation8 + $0xc0] sm:$0xff]
          %v506 = vld [vmem:[#allocation8 + $0xc8] sm:$0xff]
          %v507 = vld [vmem:[#allocation8 + $0xd0] sm:$0xff]
          %v508 = vld [vmem:[#allocation8 + $0xd8] sm:$0xff]
          %v509 = vld [vmem:[#allocation8 + $0xe0] sm:$0xff]
          %v510 = vld [vmem:[#allocation8 + $0xe8] sm:$0xff]
          %v511 = vld [vmem:[#allocation8 + $0xf0] sm:$0xff]
          %v512 = vld [vmem:[#allocation8 + $0xf8] sm:$0xff]
          %v513 = vld [vmem:[%s4] sm:$0x3]
          %v515 = vlaneseq
          %v516 = vshrl.u32 %v515, 7
          %v517 = vsub.s32 0, %v516
          %v518 = vrot.slane %v513, %v517
          %v519 = vlaneseq
          %v520 = vshrl.u32 %v519, 7
          %v521 = vsub.s32 1, %v520
          %v522 = vrot.slane %v513, %v521
          %v557 = vunpack.c.l.b16 %v481
          %v558 = vunpack.c.h.b16 %v481
          %v559 = vunpack.c.l.b16 %v482
          %v560 = vunpack.c.h.b16 %v482
          %v561 = vunpack.c.l.b16 %v483
          %v562 = vunpack.c.h.b16 %v483
          %v563 = vunpack.c.l.b16 %v484
          %v564 = vunpack.c.h.b16 %v484
          %v565 = vunpack.c.l.b16 %v485
          %v566 = vunpack.c.h.b16 %v485
          %v567 = vunpack.c.l.b16 %v486
          %v568 = vunpack.c.h.b16 %v486
          %v569 = vunpack.c.l.b16 %v487
          %v570 = vunpack.c.h.b16 %v487
          %v571 = vunpack.c.l.b16 %v488
          %v572 = vunpack.c.h.b16 %v488
          %v573 = vunpack.c.l.b16 %v489
          %v574 = vunpack.c.h.b16 %v489
          %v575 = vunpack.c.l.b16 %v490
          %v576 = vunpack.c.h.b16 %v490
          %v577 = vunpack.c.l.b16 %v491
          %v578 = vunpack.c.h.b16 %v491
          %v579 = vunpack.c.l.b16 %v492
          %v580 = vunpack.c.h.b16 %v492
          %v581 = vunpack.c.l.b16 %v493
          %v582 = vunpack.c.h.b16 %v493
          %v583 = vunpack.c.l.b16 %v494
          %v584 = vunpack.c.h.b16 %v494
          %v585 = vunpack.c.l.b16 %v495
          %v586 = vunpack.c.h.b16 %v495
          %v587 = vunpack.c.l.b16 %v496
          %v588 = vunpack.c.h.b16 %v496
          %v589 = vunpack.c.l.b16 %v497
          %v590 = vunpack.c.h.b16 %v497
          %v591 = vunpack.c.l.b16 %v498
          %v592 = vunpack.c.h.b16 %v498
          %v593 = vunpack.c.l.b16 %v499
          %v594 = vunpack.c.h.b16 %v499
          %v595 = vunpack.c.l.b16 %v500
          %v596 = vunpack.c.h.b16 %v500
          %v597 = vunpack.c.l.b16 %v501
          %v598 = vunpack.c.h.b16 %v501
          %v599 = vunpack.c.l.b16 %v502
          %v600 = vunpack.c.h.b16 %v502
          %v601 = vunpack.c.l.b16 %v503
          %v602 = vunpack.c.h.b16 %v503
          %v603 = vunpack.c.l.b16 %v504
          %v604 = vunpack.c.h.b16 %v504
          %v605 = vunpack.c.l.b16 %v505
          %v606 = vunpack.c.h.b16 %v505
          %v607 = vunpack.c.l.b16 %v506
          %v608 = vunpack.c.h.b16 %v506
          %v609 = vunpack.c.l.b16 %v507
          %v610 = vunpack.c.h.b16 %v507
          %v611 = vunpack.c.l.b16 %v508
          %v612 = vunpack.c.h.b16 %v508
          %v613 = vunpack.c.l.b16 %v509
          %v614 = vunpack.c.h.b16 %v509
          %v615 = vunpack.c.l.b16 %v510
          %v616 = vunpack.c.h.b16 %v510
          %v617 = vunpack.c.l.b16 %v511
          %v618 = vunpack.c.h.b16 %v511
          %v619 = vunpack.c.l.b16 %v512
          %v620 = vunpack.c.h.b16 %v512
          %v621 = vpack.c.b16 %v559, %v557
          %v622 = vpack.c.b16 %v560, %v558
          %v623 = vpack.c.b16 %v563, %v561
          %v624 = vpack.c.b16 %v564, %v562
          %v625 = vpack.c.b16 %v567, %v565
          %v626 = vpack.c.b16 %v568, %v566
          %v627 = vpack.c.b16 %v571, %v569
          %v628 = vpack.c.b16 %v572, %v570
          %v629 = vpack.c.b16 %v575, %v573
          %v630 = vpack.c.b16 %v576, %v574
          %v631 = vpack.c.b16 %v579, %v577
          %v632 = vpack.c.b16 %v580, %v578
          %v633 = vpack.c.b16 %v583, %v581
          %v634 = vpack.c.b16 %v584, %v582
          %v635 = vpack.c.b16 %v587, %v585
          %v636 = vpack.c.b16 %v588, %v586
          %v637 = vpack.c.b16 %v591, %v589
          %v638 = vpack.c.b16 %v592, %v590
          %v639 = vpack.c.b16 %v595, %v593
          %v640 = vpack.c.b16 %v596, %v594
          %v641 = vpack.c.b16 %v599, %v597
          %v642 = vpack.c.b16 %v600, %v598
          %v643 = vpack.c.b16 %v603, %v601
          %v644 = vpack.c.b16 %v604, %v602
          %v645 = vpack.c.b16 %v607, %v605
          %v646 = vpack.c.b16 %v608, %v606
          %v647 = vpack.c.b16 %v611, %v609
          %v648 = vpack.c.b16 %v612, %v610
          %v649 = vpack.c.b16 %v615, %v613
          %v650 = vpack.c.b16 %v616, %v614
          %v651 = vpack.c.b16 %v619, %v617
          %v652 = vpack.c.b16 %v620, %v618
          %685 = vmatprep.subr.bf16.mxu0 %v622
          %686 = vmatpush1.bf16.msra.mxu0 %v621
          %687 = vmatprep.subr.bf16.mxu0 %v624
          %688 = vmatpush1.bf16.msra.mxu0 %v623
          %689 = vmatprep.subr.bf16.mxu0 %v626
          %690 = vmatpush1.bf16.msra.mxu0 %v625
          %691 = vmatprep.subr.bf16.mxu0 %v628
          %692 = vmatpush1.bf16.msra.mxu0 %v627
          %693 = vmatprep.subr.bf16.mxu0 %v630
          %694 = vmatpush1.bf16.msra.mxu0 %v629
          %695 = vmatprep.subr.bf16.mxu0 %v632
          %696 = vmatpush1.bf16.msra.mxu0 %v631
          %697 = vmatprep.subr.bf16.mxu0 %v634
          %698 = vmatpush1.bf16.msra.mxu0 %v633
          %699 = vmatprep.subr.bf16.mxu0 %v636
          %700 = vmatpush1.bf16.msra.mxu0 %v635
          %701 = vmatprep.subr.bf16.mxu0 %v638
          %702 = vmatpush1.bf16.msra.mxu0 %v637
          %703 = vmatprep.subr.bf16.mxu0 %v640
          %704 = vmatpush1.bf16.msra.mxu0 %v639
          %705 = vmatprep.subr.bf16.mxu0 %v642
          %706 = vmatpush1.bf16.msra.mxu0 %v641
          %707 = vmatprep.subr.bf16.mxu0 %v644
          %708 = vmatpush1.bf16.msra.mxu0 %v643
          %709 = vmatprep.subr.bf16.mxu0 %v646
          %710 = vmatpush1.bf16.msra.mxu0 %v645
          %711 = vmatprep.subr.bf16.mxu0 %v648
          %712 = vmatpush1.bf16.msra.mxu0 %v647
          %713 = vmatprep.subr.bf16.mxu0 %v650
          %714 = vmatpush1.bf16.msra.mxu0 %v649
          %715 = vmatprep.subr.bf16.mxu0 %v652
          %716 = vmatpush1.bf16.msra.mxu0 %v651
          %717 = vmatprep.mubr.bf16.mxu0 %v480
          %718 = vmatmul.mubr.bf16.gmra.mrb[0].mxu0 %v479
          %v719 = vpop.f32.mrb[0].mxu0
          %v720 = vadd.f32 %v518, %v719
          %v721 = vpop.f32.mrb[0].mxu0
          %v722 = vadd.f32 %v522, %v721
          %v723 = vpop.f32.mrb[0].mxu0
          %v724 = vpop.f32.mrb[0].mxu0
          %725 = vdwg.mxu0
          %v726 = vmax.f32 %v720, 0.0
          %v727 = vmax.f32 %v722, 0.0
          %728 = vst [vmem:[#allocation9] sm:$0xff] %v726
          %729 = vst [vmem:[#allocation9 + $0x8] sm:$0xff] %v727
        $region60: #{tpu_custom_call.1} parent=39 // pred_fallthru
          _
        // Predicated region
        $region61: #{tpu_custom_call.1} parent=39 // pred_check
          %p730 = pneg %p170
        $region62: #{tpu_custom_call.1} parent=39 // pred_check_branch
          %732 = sbr.rel (%p730) target = $region64
        $region63: #{tpu_custom_call.1} parent=39 // pred_region
          %s734 = ssub.s32 256, 256
          %735 = vsyncadd [#allocation5], %s734
          %s736 = smul.addr %s27, 2
          %s737 = smul.addr %s736, 128
          %s738 = scalar_lea.hbm %s5, %s737
          %s740 = sshll.u32 [#allocation9], 4
          %s741 = int_to_ptr.vmem [resolvable:$true] %s740
          %743 = dma.vmem_to_hbm [thread:$0]  %s741, 256, %s738, [#allocation5]
        $region64: #{tpu_custom_call.1} parent=39 // pred_fallthru
          _
        // Predicated region
        $region65: #{tpu_custom_call.1} parent=39 // pred_check
          %p744 = pneg %p170
        $region66: #{tpu_custom_call.1} parent=39 // pred_check_branch
          %746 = sbr.rel (%p744) target = $region68
        $region67: #{tpu_custom_call.1} parent=39 // pred_region
          %747 = dma.done [#allocation5], 256
        $region68: #{tpu_custom_call.1} parent=39 // pred_fallthru
          _
      $region40: #{tpu_custom_call.1} parent=5 // pred_fallthru
        _
      %p748 = scmp.le.s32.totalorder 2, %s18
      // Predicated region
      $region69: #{tpu_custom_call.1} parent=5 // pred_check
        %p749 = pneg %p748
      $region70: #{tpu_custom_call.1} parent=5 // pred_check_branch
        %751 = sbr.rel (%p749) target = $region72
      $region71: #{tpu_custom_call.1} parent=5 // pred_region
        %s752 = ssub.s32 %s18, 2
      $region72: #{tpu_custom_call.1} parent=5 // pred_fallthru
        _
    $region6: #{tpu_custom_call.1} parent=1 // loop_footer
      %s22 = sadd.s32 1, %s18
    $region7: #{tpu_custom_call.1} parent=1 // loop_footer_branch
      %17 = sbr.rel target = $region3
    $region8: #{tpu_custom_call.1} parent=1 // loop_exit
      _
    %753 = vsyncpa [#allocation4], 1
    %s754 = scalar_lea.sflag [#allocation4], 1
    %755 = vsyncpa %s754, 1
    %756 = vsyncpa [#allocation7], 1
    %s757 = scalar_lea.sflag [#allocation7], 1
    %758 = vsyncpa %s757, 1
    %759 = vsyncpa [#allocation5], 1
    %s760 = scalar_lea.sflag [#allocation5], 1
    %761 = vsyncpa %s760, 1

</llo_original>
